<compile_context>
chip_gen: v7x
topology: tpu7x:2x2x1
jax: 0.10.0
libtpu: 0.0.40
codegen_flags: <defaults>
</compile_context>

<pallas_src>
import jax
import jax.numpy as jnp
from jax.experimental import pallas as pl
from jax.experimental.pallas import tpu as pltpu

FILTER_SIZES = (2, 3, 4)
NUM_FILTERS = 2
FEAT_DIM = NUM_FILTERS * len(FILTER_SIZES)      # 6 pooled features
TOTAL_COLS = sum(FILTER_SIZES) * NUM_FILTERS    # 18 packed conv output columns
C_PAD = 128                                     # lane-dense class padding


def textcnn_kernel(x_ref, wconv_ref, bconv_ref, wl_ref, bl_ref, out_ref):
    # x_ref:     [BT*S, H]        native dtype (f32 or bf16) activations
    # wconv_ref: [H, TOTAL_COLS]  bf16 packed conv weights (per K, per shift k)
    # bconv_ref: [1, FEAT_DIM]    f32 packed conv biases
    # wl_ref:    [FEAT_DIM, C_PAD] f32 linear weight (zero-padded classes)
    # bl_ref:    [1, C_PAD]       f32 linear bias (-1e30 on padded classes)
    # out_ref:   [BT, C_PAD]      f32 softmax probabilities
    rows, _ = x_ref.shape
    BT = out_ref.shape[0]
    S = rows // BT

    # Cast to bf16 on the VPU right before the single fused MXU matmul
    # (replaces 9 tiny per-shift convolution matmuls).  f32 accumulation.
    x = x_ref[...].astype(jnp.bfloat16)
    y = jnp.dot(x, wconv_ref[...], preferred_element_type=jnp.float32)  # [rows, 18]

    # Temporal shifts on the NARROW 18-lane result via XLU rolls.
    # y_sh[k][i] = y[(i + k) mod rows]  (jnp.roll semantics: shift = rows - k).
    y_sh = [y]
    for k in range(1, max(FILTER_SIZES)):
        y_sh.append(pltpu.roll(y, shift=rows - k, axis=0))

    # Time index within each sequence, used to mask invalid (wrapped) rows.
    t = jax.lax.broadcasted_iota(jnp.int32, (rows, 1), 0) % S

    feats = []
    col = 0    # column offset into the packed conv result / weights
    foff = 0   # feature offset into conv bias / linear weight rows
    for K in FILTER_SIZES:
        L = S - K + 1                                   # valid conv output length
        acc = y_sh[0][:, col:col + NUM_FILTERS]
        for k in range(1, K):
            c0 = col + k * NUM_FILTERS
            acc = acc + y_sh[k][:, c0:c0 + NUM_FILTERS]
        acc = acc + bconv_ref[:, foff:foff + NUM_FILTERS]   # conv bias
        acc = jnp.maximum(acc, 0.0)                          # ReLU
        # Mask t >= L to 0: valid because values are post-ReLU (>= 0), so the
        # max over {valid, zeros} equals the max over the valid window.
        acc = acc * (t < L).astype(jnp.float32)
        feats.append(acc)
        col += K * NUM_FILTERS
        foff += NUM_FILTERS

    # Max-pool over time (one narrow reshape + one sublane reduction), then a
    # single fused [BT, 6] @ [6, 128] linear matmul for all filter sizes.
    relu_all = jnp.concatenate(feats, axis=1)               # [rows, 6]
    feat = jnp.max(relu_all.reshape(BT, S, FEAT_DIM), axis=1)   # [BT, 6]
    logits = bl_ref[...] + jnp.dot(feat, wl_ref[...],
                                   preferred_element_type=jnp.float32)

    # Softmax(dim=1), numerically stable; padded classes have logit -1e30 so
    # their exp is exactly 0.  Exact denominator (correctness review).
    m = jnp.max(logits, axis=1, keepdims=True)
    e = jnp.exp(logits - m)
    out_ref[...] = (e / jnp.sum(e, axis=1, keepdims=True)).astype(out_ref.dtype)


def _choose_b_tile(B, S, H, x_bytes=4):
    """Batch rows per grid step (VMEM-aware, prefers divisors of B).

    Per-batch-row VMEM accounting: double-buffered x block plus the f32,
    lane-padded (18 -> 128) conv intermediates (y, rolled copies, per-K temps):
        S * (2 * x_bytes * H + 5 * 4 * 128) bytes.
    Budget ~20 MiB of accounted usage: fits comfortably under v7x's 32 MiB
    scoped VMEM while still giving multi-MiB blocks on v5e/v6e (128 MiB).
    """
    per_row = S * (2 * x_bytes * H + 5 * 4 * 128)
    vmem_cap = max(1, (20 * 1024 * 1024) // per_row)
    # Prefer >=2 grid steps so the "parallel" batch axis can be sharded across
    # v7x's two TensorCores; fall back to the pure VMEM cap if no divisor fits.
    two_step_cap = min(vmem_cap, max(1, B // 2))
    for cap in (two_step_cap, vmem_cap):
        d = (cap // 8) * 8
        while d >= 8:
            if B % d == 0:
                return d          # multiple-of-8 divisor of B -> no padding
            d -= 8
    if B <= vmem_cap:
        return B                  # single tile covering the whole batch
    return max(8, (vmem_cap // 8) * 8)   # rare fallback: batch padded in wrapper


def _pack_params(params, num_classes):
    """Pack per-filter-size weights into the slabs the kernel expects."""
    assert num_classes <= C_PAD, "num_classes exceeds the 128-lane class padding"
    cols, cbias = [], []
    for K in FILTER_SIZES:
        w = params[f"w{K}"]                        # [K, H, F]
        for k in range(K):
            cols.append(w[k])                      # [H, F]
        cbias.append(params[f"b{K}"].reshape(-1))  # [F]
    w_conv = jnp.concatenate(cols, axis=1).astype(jnp.bfloat16)         # [H, 18]
    b_conv = jnp.concatenate(cbias).reshape(1, -1).astype(jnp.float32)  # [1, 6]

    wl = params["wl"].astype(jnp.float32)          # [FEAT_DIM, C]
    bl = params["bl"].astype(jnp.float32)          # [1, C]
    wl_pad = jnp.zeros((wl.shape[0], C_PAD), jnp.float32).at[:, :num_classes].set(wl)
    bl_pad = jnp.full((1, C_PAD), -1e30, jnp.float32).at[:, :num_classes].set(bl)
    return w_conv, b_conv, wl_pad, bl_pad


def textcnn_forward(x, params, num_classes, b_tile=None):
    """x: [B, S, H] last_hidden_state (native dtype). Returns [B, C] probs."""
    B, S, H = x.shape
    w_conv, b_conv, wl_pad, bl_pad = _pack_params(params, num_classes)

    if b_tile is None:
        b_tile = _choose_b_tile(B, S, H, jnp.dtype(x.dtype).itemsize)
    n_tiles = pl.cdiv(B, b_tile)
    B_pad = n_tiles * b_tile
    assert (b_tile % 8 == 0) or (n_tiles == 1), (
        "b_tile must be a multiple of 8 unless it covers the whole batch")

    # Free metadata reshape (row-major contiguous): [B, S, H] -> [B*S, H].
    x2 = x.reshape(B * S, H)
    if B_pad != B:
        # Rare fallback (no multiple-of-8 divisor of B fits in VMEM, or an
        # explicit ragged override): pad the batch with zero rows.
        x2 = jnp.pad(x2, ((0, (B_pad - B) * S), (0, 0)))

    out = pl.pallas_call(
        textcnn_kernel,
        out_shape=jax.ShapeDtypeStruct((B_pad, C_PAD), jnp.float32),
        grid=(n_tiles,),
        in_specs=[
            # x stream: native dtype, bf16 cast happens inside the kernel.
            # (If a profile shows exposed DMA at very small blocks, add
            #  pipeline_mode=pl.Buffered(3) here.)
            pl.BlockSpec((b_tile * S, H), lambda b: (b, 0)),
            pl.BlockSpec(w_conv.shape, lambda b: (0, 0)),
            pl.BlockSpec(b_conv.shape, lambda b: (0, 0)),
            pl.BlockSpec(wl_pad.shape, lambda b: (0, 0)),
            pl.BlockSpec(bl_pad.shape, lambda b: (0, 0)),
        ],
        out_specs=pl.BlockSpec((b_tile, C_PAD), lambda b: (b, 0)),
        compiler_params=pltpu.CompilerParams(
            dimension_semantics=("parallel",),
            vmem_limit_bytes=32 * 1024 * 1024,     # safe on v7x's 64 MiB VMEM
        ),
    )(x2, w_conv, b_conv, wl_pad, bl_pad)

    return out[:B, :num_classes]


def textcnn_reference(x, params, num_classes):
    """Pure-JAX (f32) reference of the PyTorch forward (eval mode)."""
    del num_classes
    x32 = x.astype(jnp.float32)
    B, S, H = x.shape
    feats = []
    for K in FILTER_SIZES:
        w = params[f"w{K}"].astype(jnp.float32)   # [K, H, F]
        b = params[f"b{K}"].astype(jnp.float32)   # [1, F]
        L = S - K + 1
        acc = jnp.zeros((B, L, NUM_FILTERS), jnp.float32)
        for k in range(K):
            acc = acc + jnp.einsum("bsh,hf->bsf", x32[:, k:k + L, :], w[k])
        acc = jax.nn.relu(acc + b)
        feats.append(jnp.max(acc, axis=1))
    feat = jnp.concatenate(feats, axis=1)
    logits = feat @ params["wl"] + params["bl"]
    return jax.nn.softmax(logits, axis=1)


def init_params(key, hidden_size, num_classes):
    """Deterministic synthetic parameters matching the nn.Module shapes.

    PyTorch shapes: conv weight [F, 1, K, H] -> stored here as [K, H, F]
    (pre-transposed so x_slice @ w[k] works directly); Linear weight
    [C, F*len(filters)] -> stored transposed as [F*len, C].
    """
    params = {}
    keys = jax.random.split(key, 2 * len(FILTER_SIZES) + 2)
    i = 0
    for K in FILTER_SIZES:
        params[f"w{K}"] = (0.1 * jax.random.normal(
            keys[i], (K, hidden_size, NUM_FILTERS))).astype(jnp.float32)
        i += 1
        params[f"b{K}"] = (0.1 * jax.random.normal(
            keys[i], (1, NUM_FILTERS))).astype(jnp.float32)
        i += 1
    params["wl"] = (0.1 * jax.random.normal(
        keys[i], (FEAT_DIM, num_classes))).astype(jnp.float32)
    params["bl"] = (0.1 * jax.random.normal(
        keys[i + 1], (1, num_classes))).astype(jnp.float32)
    return params


if __name__ == "__main__":
    S, H, C = 8, 32, 3   # seq, hidden, num_classes
    key = jax.random.PRNGKey(0)
    k_p, k_x1, k_x2, k_x3 = jax.random.split(key, 4)
    params = init_params(k_p, H, C)

    # 1) Tiny batch: single tile (b_tile == B), no padding.
    B1 = 2
    x1 = jax.random.normal(k_x1, (B1, S, H), dtype=jnp.float32)
    p1 = jax.block_until_ready(textcnn_forward(x1, params, C))
    r1 = textcnn_reference(x1, params, C)
    assert p1.shape == (B1, C)
    assert bool(jnp.all(jnp.isfinite(p1)))
    assert bool(jnp.allclose(jnp.sum(p1, axis=1), 1.0, atol=1e-3))
    assert bool(jnp.allclose(p1, r1, atol=1e-2))

    # 2) Multi-tile grid: b_tile=8 divides B -> 2 parallel grid steps, no pad.
    B2 = 16
    x2 = jax.random.normal(k_x2, (B2, S, H), dtype=jnp.float32)
    p2 = jax.block_until_ready(textcnn_forward(x2, params, C))
    r2 = textcnn_reference(x2, params, C)
    assert p2.shape == (B2, C)
    assert bool(jnp.all(jnp.isfinite(p2)))
    assert bool(jnp.allclose(jnp.sum(p2, axis=1), 1.0, atol=1e-3))
    assert bool(jnp.allclose(p2, r2, atol=1e-2))

    # 3) Ragged batch with an explicit tile override -> padding fallback path.
    B3 = 20
    x3 = jax.random.normal(k_x3, (B3, S, H), dtype=jnp.float32)
    p3 = jax.block_until_ready(textcnn_forward(x3, params, C, b_tile=8))
    r3 = textcnn_reference(x3, params, C)
    assert p3.shape == (B3, C)
    assert bool(jnp.all(jnp.isfinite(p3)))
    assert bool(jnp.allclose(jnp.sum(p3, axis=1), 1.0, atol=1e-3))
    assert bool(jnp.allclose(p3, r3, atol=1e-2))

    print("KERNEL_OK")
</pallas_src>

<mosaic_0001>
module attributes {stable_mosaic.version = 11 : i64} {
  func.func @textcnn_kernel(%arg0: i32, %arg1: memref<16x32xf32, #tpu.memory_space<vmem>>, %arg2: memref<32x18xbf16, #tpu.memory_space<vmem>>, %arg3: memref<1x6xf32, #tpu.memory_space<vmem>>, %arg4: memref<6x128xf32, #tpu.memory_space<vmem>>, %arg5: memref<1x128xf32, #tpu.memory_space<vmem>>, %arg6: memref<2x128xf32, #tpu.memory_space<vmem>>) attributes {dimension_semantics = [#tpu.dimension_semantics<parallel>], iteration_bounds = array<i64: 1>, scalar_prefetch = 0 : i64, scratch_operands = 0 : i64, tpu.core_type = #tpu.core_type<tc>, window_params = [{transform_indices = @transform_0, window_bounds = array<i64: 16, 32>}, {pipeline_mode = #tpu.pipeline_mode<synchronous>, transform_indices = @transform_1, window_bounds = array<i64: 32, 18>}, {pipeline_mode = #tpu.pipeline_mode<synchronous>, transform_indices = @transform_2, window_bounds = array<i64: 1, 6>}, {pipeline_mode = #tpu.pipeline_mode<synchronous>, transform_indices = @transform_3, window_bounds = array<i64: 6, 128>}, {pipeline_mode = #tpu.pipeline_mode<synchronous>, transform_indices = @transform_4, window_bounds = array<i64: 1, 128>}, {transform_indices = @transform_5, window_bounds = array<i64: 2, 128>}]} {
    %c0 = arith.constant 0 : index
    %c0_0 = arith.constant 0 : index
    %0 = vector.load %arg1[%c0, %c0_0] : memref<16x32xf32, #tpu.memory_space<vmem>>, vector<16x32xf32>
    %1 = arith.truncf %0 : vector<16x32xf32> to vector<16x32xbf16>
    %c0_1 = arith.constant 0 : index
    %c0_2 = arith.constant 0 : index
    %2 = vector.load %arg2[%c0_1, %c0_2] : memref<32x18xbf16, #tpu.memory_space<vmem>>, vector<32x18xbf16>
    %cst = arith.constant dense<0.000000e+00> : vector<16x18xf32>
    %3 = tpu.matmul %1, %2, %cst {dimension_numbers = #tpu.dot_dimension_numbers<[1], [0], [0], [1], [0, 0, 1, 1], [], []>} : vector<16x32xbf16>, vector<32x18xbf16>, vector<16x18xf32> -> vector<16x18xf32>
    %c15_i32 = arith.constant 15 : i32
    %4 = tpu.dynamic_rotate %3 by %c15_i32 dim 0 : vector<16x18xf32>, i32 -> vector<16x18xf32>
    %c14_i32 = arith.constant 14 : i32
    %5 = tpu.dynamic_rotate %3 by %c14_i32 dim 0 : vector<16x18xf32>, i32 -> vector<16x18xf32>
    %c13_i32 = arith.constant 13 : i32
    %6 = tpu.dynamic_rotate %3 by %c13_i32 dim 0 : vector<16x18xf32>, i32 -> vector<16x18xf32>
    %7 = tpu.iota {dimensions = array<i32: 0>} : vector<16x1xi32>
    %c8_i32 = arith.constant 8 : i32
    %c0_i32 = arith.constant 0 : i32
    %8 = arith.cmpi eq, %c8_i32, %c0_i32 : i32
    %c1_i32 = arith.constant 1 : i32
    %9 = arith.select %8, %c1_i32, %c8_i32 : i32
    %10 = vector.broadcast %9 : i32 to vector<16x1xi32>
    %11 = arith.remsi %7, %10 : vector<16x1xi32>
    %c0_i32_3 = arith.constant 0 : i32
    %12 = vector.broadcast %c0_i32_3 : i32 to vector<16x1xi32>
    %13 = arith.cmpi ne, %11, %12 : vector<16x1xi32>
    %c0_i32_4 = arith.constant 0 : i32
    %14 = vector.broadcast %c0_i32_4 : i32 to vector<16x1xi32>
    %15 = arith.cmpi slt, %11, %14 : vector<16x1xi32>
    %c0_i32_5 = arith.constant 0 : i32
    %16 = arith.cmpi slt, %9, %c0_i32_5 : i32
    %17 = vector.broadcast %16 : i1 to vector<16x1xi1>
    %18 = vector.broadcast %17 : vector<16x1xi1> to vector<16x1xi1>
    %19 = arith.xori %15, %18 : vector<16x1xi1>
    %20 = arith.andi %19, %13 : vector<16x1xi1>
    %21 = vector.broadcast %9 : i32 to vector<16x1xi32>
    %22 = arith.addi %11, %21 : vector<16x1xi32>
    %23 = arith.select %20, %22, %11 : vector<16x1xi1>, vector<16x1xi32>
    %24 = vector.extract_strided_slice %3 {offsets = [0, 0], sizes = [16, 2], strides = [1, 1]} : vector<16x18xf32> to vector<16x2xf32>
    %25 = vector.extract_strided_slice %4 {offsets = [0, 2], sizes = [16, 2], strides = [1, 1]} : vector<16x18xf32> to vector<16x2xf32>
    %26 = arith.addf %24, %25 : vector<16x2xf32>
    %c0_6 = arith.constant 0 : index
    %c0_7 = arith.constant 0 : index
    %27 = vector.load %arg3[%c0_6, %c0_7] : memref<1x6xf32, #tpu.memory_space<vmem>>, vector<1x2xf32>
    %28 = vector.broadcast %27 : vector<1x2xf32> to vector<16x2xf32>
    %29 = arith.addf %26, %28 : vector<16x2xf32>
    %cst_8 = arith.constant 0.000000e+00 : f32
    %30 = vector.broadcast %cst_8 : f32 to vector<16x2xf32>
    %31 = arith.maximumf %29, %30 : vector<16x2xf32>
    %c7_i32 = arith.constant 7 : i32
    %32 = vector.broadcast %c7_i32 : i32 to vector<16x1xi32>
    %33 = arith.cmpi slt, %23, %32 : vector<16x1xi32>
    %34 = arith.extui %33 : vector<16x1xi1> to vector<16x1xi32>
    %35 = arith.sitofp %34 : vector<16x1xi32> to vector<16x1xf32>
    %36 = vector.broadcast %35 : vector<16x1xf32> to vector<16x2xf32>
    %37 = arith.mulf %31, %36 : vector<16x2xf32>
    %38 = vector.extract_strided_slice %3 {offsets = [0, 4], sizes = [16, 2], strides = [1, 1]} : vector<16x18xf32> to vector<16x2xf32>
    %39 = vector.extract_strided_slice %4 {offsets = [0, 6], sizes = [16, 2], strides = [1, 1]} : vector<16x18xf32> to vector<16x2xf32>
    %40 = arith.addf %38, %39 : vector<16x2xf32>
    %41 = vector.extract_strided_slice %5 {offsets = [0, 8], sizes = [16, 2], strides = [1, 1]} : vector<16x18xf32> to vector<16x2xf32>
    %42 = arith.addf %40, %41 : vector<16x2xf32>
    %c0_9 = arith.constant 0 : index
    %c2 = arith.constant 2 : index
    %43 = vector.load %arg3[%c0_9, %c2] : memref<1x6xf32, #tpu.memory_space<vmem>>, vector<1x2xf32>
    %44 = vector.broadcast %43 : vector<1x2xf32> to vector<16x2xf32>
    %45 = arith.addf %42, %44 : vector<16x2xf32>
    %cst_10 = arith.constant 0.000000e+00 : f32
    %46 = vector.broadcast %cst_10 : f32 to vector<16x2xf32>
    %47 = arith.maximumf %45, %46 : vector<16x2xf32>
    %c6_i32 = arith.constant 6 : i32
    %48 = vector.broadcast %c6_i32 : i32 to vector<16x1xi32>
    %49 = arith.cmpi slt, %23, %48 : vector<16x1xi32>
    %50 = arith.extui %49 : vector<16x1xi1> to vector<16x1xi32>
    %51 = arith.sitofp %50 : vector<16x1xi32> to vector<16x1xf32>
    %52 = vector.broadcast %51 : vector<16x1xf32> to vector<16x2xf32>
    %53 = arith.mulf %47, %52 : vector<16x2xf32>
    %54 = vector.extract_strided_slice %3 {offsets = [0, 10], sizes = [16, 2], strides = [1, 1]} : vector<16x18xf32> to vector<16x2xf32>
    %55 = vector.extract_strided_slice %4 {offsets = [0, 12], sizes = [16, 2], strides = [1, 1]} : vector<16x18xf32> to vector<16x2xf32>
    %56 = arith.addf %54, %55 : vector<16x2xf32>
    %57 = vector.extract_strided_slice %5 {offsets = [0, 14], sizes = [16, 2], strides = [1, 1]} : vector<16x18xf32> to vector<16x2xf32>
    %58 = arith.addf %56, %57 : vector<16x2xf32>
    %59 = vector.extract_strided_slice %6 {offsets = [0, 16], sizes = [16, 2], strides = [1, 1]} : vector<16x18xf32> to vector<16x2xf32>
    %60 = arith.addf %58, %59 : vector<16x2xf32>
    %c0_11 = arith.constant 0 : index
    %c4 = arith.constant 4 : index
    %61 = vector.load %arg3[%c0_11, %c4] : memref<1x6xf32, #tpu.memory_space<vmem>>, vector<1x2xf32>
    %62 = vector.broadcast %61 : vector<1x2xf32> to vector<16x2xf32>
    %63 = arith.addf %60, %62 : vector<16x2xf32>
    %cst_12 = arith.constant 0.000000e+00 : f32
    %64 = vector.broadcast %cst_12 : f32 to vector<16x2xf32>
    %65 = arith.maximumf %63, %64 : vector<16x2xf32>
    %c5_i32 = arith.constant 5 : i32
    %66 = vector.broadcast %c5_i32 : i32 to vector<16x1xi32>
    %67 = arith.cmpi slt, %23, %66 : vector<16x1xi32>
    %68 = arith.extui %67 : vector<16x1xi1> to vector<16x1xi32>
    %69 = arith.sitofp %68 : vector<16x1xi32> to vector<16x1xf32>
    %70 = vector.broadcast %69 : vector<16x1xf32> to vector<16x2xf32>
    %71 = arith.mulf %65, %70 : vector<16x2xf32>
    %72 = tpu.concatenate %37, %53, %71 in 1 : vector<16x2xf32>, vector<16x2xf32>, vector<16x2xf32> -> vector<16x6xf32>
    %73 = vector.shape_cast %72 : vector<16x6xf32> to vector<2x8x6xf32>
    %cst_13 = arith.constant dense<0xFF800000> : vector<2x6xf32>
    %74 = vector.multi_reduction <maximumf>, %73, %cst_13 [1] : vector<2x8x6xf32> to vector<2x6xf32>
    %c0_14 = arith.constant 0 : index
    %c0_15 = arith.constant 0 : index
    %75 = vector.load %arg5[%c0_14, %c0_15] : memref<1x128xf32, #tpu.memory_space<vmem>>, vector<1x128xf32>
    %c0_16 = arith.constant 0 : index
    %c0_17 = arith.constant 0 : index
    %76 = vector.load %arg4[%c0_16, %c0_17] : memref<6x128xf32, #tpu.memory_space<vmem>>, vector<6x128xf32>
    %cst_18 = arith.constant dense<0.000000e+00> : vector<2x128xf32>
    %77 = tpu.matmul %74, %76, %cst_18 {dimension_numbers = #tpu.dot_dimension_numbers<[1], [0], [0], [1], [0, 0, 1, 1], [], []>} : vector<2x6xf32>, vector<6x128xf32>, vector<2x128xf32> -> vector<2x128xf32>
    %78 = vector.broadcast %75 : vector<1x128xf32> to vector<2x128xf32>
    %79 = arith.addf %78, %77 : vector<2x128xf32>
    %cst_19 = arith.constant dense<0xFF800000> : vector<2xf32>
    %80 = vector.multi_reduction <maximumf>, %79, %cst_19 [1] : vector<2x128xf32> to vector<2xf32>
    %81 = vector.shape_cast %80 : vector<2xf32> to vector<2x1xf32>
    %82 = vector.broadcast %81 : vector<2x1xf32> to vector<2x128xf32>
    %83 = arith.subf %79, %82 : vector<2x128xf32>
    %84 = math.exp %83 : vector<2x128xf32>
    %cst_20 = arith.constant dense<0.000000e+00> : vector<2xf32>
    %85 = vector.multi_reduction <add>, %84, %cst_20 [1] : vector<2x128xf32> to vector<2xf32>
    %86 = vector.shape_cast %85 : vector<2xf32> to vector<2x1xf32>
    %87 = vector.broadcast %86 : vector<2x1xf32> to vector<2x128xf32>
    %88 = arith.divf %84, %87 : vector<2x128xf32>
    %c0_21 = arith.constant 0 : index
    %c0_22 = arith.constant 0 : index
    %89 = vector.load %arg6[%c0_21, %c0_22] : memref<2x128xf32, #tpu.memory_space<vmem>>, vector<2x128xf32>
    tpu.vector_store %arg6[%c0_21, %c0_22], %88 {strides = array<i32>} : memref<2x128xf32, #tpu.memory_space<vmem>>, vector<2x128xf32>,
    return
  }
  func.func @transform_0(%arg0: i32) -> (i32, i32) {
    %c0_i32 = arith.constant 0 : i32
    %c0_i32_0 = arith.constant 0 : i32
    return %arg0, %c0_i32 : i32, i32
  }
  func.func @transform_1(%arg0: i32) -> (i32, i32) {
    %c0_i32 = arith.constant 0 : i32
    %c0_i32_0 = arith.constant 0 : i32
    %c0_i32_1 = arith.constant 0 : i32
    return %c0_i32, %c0_i32_0 : i32, i32
  }
  func.func @transform_2(%arg0: i32) -> (i32, i32) {
    %c0_i32 = arith.constant 0 : i32
    %c0_i32_0 = arith.constant 0 : i32
    %c0_i32_1 = arith.constant 0 : i32
    return %c0_i32, %c0_i32_0 : i32, i32
  }
  func.func @transform_3(%arg0: i32) -> (i32, i32) {
    %c0_i32 = arith.constant 0 : i32
    %c0_i32_0 = arith.constant 0 : i32
    %c0_i32_1 = arith.constant 0 : i32
    return %c0_i32, %c0_i32_0 : i32, i32
  }
  func.func @transform_4(%arg0: i32) -> (i32, i32) {
    %c0_i32 = arith.constant 0 : i32
    %c0_i32_0 = arith.constant 0 : i32
    %c0_i32_1 = arith.constant 0 : i32
    return %c0_i32, %c0_i32_0 : i32, i32
  }
  func.func @transform_5(%arg0: i32) -> (i32, i32) {
    %c0_i32 = arith.constant 0 : i32
    %c0_i32_0 = arith.constant 0 : i32
    return %arg0, %c0_i32 : i32, i32
  }
}

</mosaic_0001>

<llo_original>
// kernel: tpu_custom_call.1
$region0: #{tpu_custom_call.1}
  #allocation0 [shape = 'u32[]', space=smem, size = 0x4, offset = 0x4, fixed_abs, tag = 'smem constant byte address 0x4 - core index']
  #allocation1 [shape = 'u32[144,128]{1,0:T(1,128)}', space=vmem, size = 0x12000, scoped, tag = 'internal scratch']
  %s0 = inlined_call_operand.vmem [shape: f32[16,32], index: 0, kind: input, shape index: {}]
  %s1 = inlined_call_operand.vmem [shape: bf16[32,18], index: 1, kind: input, shape index: {}]
  %s2 = inlined_call_operand.vmem [shape: f32[1,6], index: 2, kind: input, shape index: {}]
  %s3 = inlined_call_operand.vmem [shape: f32[6,128], index: 3, kind: input, shape index: {}]
  %s4 = inlined_call_operand.vmem [shape: f32[1,128], index: 4, kind: input, shape index: {}]
  %s5 = inlined_call_operand.hbm [shape: f32[2,128], index: 5, kind: output, shape index: {}]
  %s6 = sld [smem:[#allocation0]]
  $region30: #{tpu_custom_call.1} parent=0
    _
  %s8 = ssub.s32 1, %s6
  %s9 = scalar_select 0, %s8, %s6
  $region1: #{tpu_custom_call.1} parent=0
    #allocation2 [shape = 'u8[1024]{0}', space=vmem, size = 0x400, scoped, tag = 'output window, operand 0, single buffered']
    #allocation3 [shape = 's32[1]{0}', space=sflag, size = 0x4, scoped, tag = 'scoped memory for tpu_custom_call.1']
    %10 = vsyncpa [#allocation3], 0
    // Predicated region
    $region2: #{tpu_custom_call.1} parent=1 // pred_check
      _
    $region3: #{tpu_custom_call.1} parent=1 // pred_check_branch
      %12 = sbr.rel (0) target = $region5
    $region4: #{tpu_custom_call.1} parent=1 // pred_region
      _
    $region5: #{tpu_custom_call.1} parent=1 // pred_fallthru
      _
    // Predicated region
    $region6: #{tpu_custom_call.1} parent=1 // pred_check
      _
    $region7: #{tpu_custom_call.1} parent=1 // pred_check_branch
      %14 = sbr.rel (0) target = $region9
    $region8: #{tpu_custom_call.1} parent=1 // pred_region
      _
    $region9: #{tpu_custom_call.1} parent=1 // pred_fallthru
      _
    // Predicated region
    $region10: #{tpu_custom_call.1} parent=1 // pred_check
      _
    $region11: #{tpu_custom_call.1} parent=1 // pred_check_branch
      %16 = sbr.rel (0) target = $region13
    $region12: #{tpu_custom_call.1} parent=1 // pred_region
      _
    $region13: #{tpu_custom_call.1} parent=1 // pred_fallthru
      _
    // Predicated region
    $region14: #{tpu_custom_call.1} parent=1 // pred_check
      _
    $region15: #{tpu_custom_call.1} parent=1 // pred_check_branch
      %18 = sbr.rel (0) target = $region17
    $region16: #{tpu_custom_call.1} parent=1 // pred_region
      _
    $region17: #{tpu_custom_call.1} parent=1 // pred_fallthru
      _
    // Predicated region
    $region18: #{tpu_custom_call.1} parent=1 // pred_check
      _
    $region19: #{tpu_custom_call.1} parent=1 // pred_check_branch
      %20 = sbr.rel (0) target = $region21
    $region20: #{tpu_custom_call.1} parent=1 // pred_region
      _
    $region21: #{tpu_custom_call.1} parent=1 // pred_fallthru
      _
    %v22 = vld [vmem:[%s0] sm:$0xff]
    %v23 = vld [vmem:[%s0 + $0x8] sm:$0xff]
    %v24 = vpack.c.bf16 %v23, %v22
    %v25 = vld [vmem:[%s1] sm:$0xf]
    %v26 = vld [vmem:[%s1 + $0x4] sm:$0xf]
    %v27 = vld [vmem:[%s1 + $0x8] sm:$0xf]
    %v28 = vld [vmem:[%s1 + $0xc] sm:$0xf]
    %v33 = vunpack.c.l.b16 %v25
    %v34 = vunpack.c.l.b16 %v26
    %v35 = vunpack.c.l.b16 %v27
    %v36 = vunpack.c.l.b16 %v28
    %v37 = vpack.c.b16 %v34, %v33
    %v38 = vpack.c.b16 %v36, %v35
    %vm41 = vcmask 261120
    %v43 = vsel %vm41, %v24, 0
    %45 = vmatprep.subr.bf16.mxu0 0
    %46 = vmatpush1.bf16.msra.mxu0 %v37
    %47 = vmatprep.subr.bf16.mxu0 0
    %48 = vmatpush1.bf16.msra.mxu0 %v38
    %49 = vmatprep.subr.bf16.mxu0 0
    %50 = vmatpush1.bf16.msra.mxu0 0
    %51 = vmatprep.subr.bf16.mxu0 0
    %52 = vmatpush1.bf16.msra.mxu0 0
    %53 = vmatprep.subr.bf16.mxu0 0
    %54 = vmatpush1.bf16.msra.mxu0 0
    %55 = vmatprep.subr.bf16.mxu0 0
    %56 = vmatpush1.bf16.msra.mxu0 0
    %57 = vmatprep.subr.bf16.mxu0 0
    %58 = vmatpush1.bf16.msra.mxu0 0
    %59 = vmatprep.subr.bf16.mxu0 0
    %60 = vmatpush1.bf16.msra.mxu0 0
    %61 = vmatprep.subr.bf16.mxu0 0
    %62 = vmatpush1.bf16.msra.mxu0 0
    %63 = vmatprep.subr.bf16.mxu0 0
    %64 = vmatpush1.bf16.msra.mxu0 0
    %65 = vmatprep.subr.bf16.mxu0 0
    %66 = vmatpush1.bf16.msra.mxu0 0
    %67 = vmatprep.subr.bf16.mxu0 0
    %68 = vmatpush1.bf16.msra.mxu0 0
    %69 = vmatprep.subr.bf16.mxu0 0
    %70 = vmatpush1.bf16.msra.mxu0 0
    %71 = vmatprep.subr.bf16.mxu0 0
    %72 = vmatpush1.bf16.msra.mxu0 0
    %73 = vmatprep.subr.bf16.mxu0 0
    %74 = vmatpush1.bf16.msra.mxu0 0
    %75 = vmatprep.subr.bf16.mxu0 0
    %76 = vmatpush1.bf16.msra.mxu0 0
    %77 = vmatprep.mubr.bf16.mxu0 0
    %78 = vmatmul.mubr.bf16.gmra.mrb[0].mxu0 %v43
    %v79 = vpop.f32.mrb[0].mxu0
    %v80 = vadd.f32 0.0, %v79
    %v81 = vpop.f32.mrb[0].mxu0
    %v82 = vpop.f32.mrb[0].mxu0
    %v83 = vadd.f32 0.0, %v82
    %v84 = vpop.f32.mrb[0].mxu0
    %85 = vdwg.mxu0
    %v86 = vrot.slane %v80, 1
    %v87 = vrot.slane %v83, 1
    %v88 = vlaneseq
    %v89 = vshrl.u32 %v88, 7
    %vm90 = vcmp.lt.s32.totalorder %v89, 7
    %v91 = vsel %vm90, %v86, %v87
    %v92 = vsel %vm90, %v87, %v86
    %v93 = vrot.slane %v80, 2
    %v94 = vrot.slane %v83, 2
    %vm95 = vcmp.lt.s32.totalorder %v89, 6
    %v96 = vsel %vm95, %v93, %v94
    %v97 = vsel %vm95, %v94, %v93
    %v98 = vrot.slane %v80, 3
    %v99 = vrot.slane %v83, 3
    %vm100 = vcmp.lt.s32.totalorder %v89, 5
    %v101 = vsel %vm100, %v98, %v99
    %v102 = vsel %vm100, %v99, %v98
    %v103 = vadd.s32 %v89, 8
    %vm104 = vcmp.lt.s32.totalorder %v89, 0
    %v105 = vsub.s32 0, %v89
    %v106 = vsel %vm104, %v105, %v89
    %v107 = vshrl.u32 %v106, 3
    %v108 = vand.u32 %v106, 7
    %v109 = vsub.s32 0, %v108
    %v110 = vsel %vm104, %v109, %v108
    %vm111 = vcmp.lt.s32.totalorder %v103, 0
    %v112 = vsub.s32 0, %v103
    %v113 = vsel %vm111, %v112, %v103
    %v114 = vshrl.u32 %v113, 3
    %v115 = vand.u32 %v113, 7
    %v116 = vsub.s32 0, %v115
    %v117 = vsel %vm111, %v116, %v115
    %vm118 = vcmp.ne.s32.totalorder %v110, 0
    %vm119 = vcmp.ne.s32.totalorder %v117, 0
    %vm120 = vcmp.lt.s32.totalorder %v110, 0
    %vm121 = vcmp.lt.s32.totalorder %v117, 0
    %vm122 = vmand %vm120, %vm118
    %vm123 = vmand %vm121, %vm119
    %v124 = vadd.s32 %v110, 8
    %v125 = vadd.s32 %v117, 8
    %v126 = vsel %vm122, %v124, %v110
    %v127 = vsel %vm123, %v125, %v117
    %130 = vrot.lane.b32.xlu0 %v91, 126
    %v131 = vpop.permute.xlu0 %130
    %132 = vrot.lane.b32.xlu0 %v92, 126
    %v133 = vpop.permute.xlu0 %132
    %v136 = vadd.f32 %v80, %v131
    %v137 = vadd.f32 %v83, %v133
    %v138 = vld [vmem:[%s2] sm:$0x1]
    %v140 = vlaneseq
    %v141 = vshrl.u32 %v140, 7
    %v142 = vsub.s32 0, %v141
    %v143 = vrot.slane %v138, %v142
    %v145 = vadd.f32 %v136, %v143
    %v146 = vadd.f32 %v137, %v143
    %v147 = vmax.f32 %v145, 0.0
    %v148 = vmax.f32 %v146, 0.0
    %vm149 = vcmp.lt.s32.totalorder %v126, 7
    %vm150 = vcmp.lt.s32.totalorder %v127, 7
    %v151 = vsel %vm149, 1, 0
    %v152 = vsel %vm150, 1, 0
    %v153 = vcvt.s32.f32 %v151
    %v154 = vcvt.s32.f32 %v152
    %v155 = vmul.f32 %v147, %v153
    %v156 = vmul.f32 %v148, %v154
    %159 = vrot.lane.b32.xlu0 %v96, 124
    %v160 = vpop.permute.xlu0 %159
    %161 = vrot.lane.b32.xlu0 %v97, 124
    %v162 = vpop.permute.xlu0 %161
    %v165 = vadd.f32 %v136, %v160
    %v166 = vadd.f32 %v137, %v162
    %167 = vrot.lane.b32.xlu0 %v143, 2
    %v168 = vpop.permute.xlu0 %167
    %v170 = vadd.f32 %v165, %v168
    %v171 = vadd.f32 %v166, %v168
    %v172 = vmax.f32 %v170, 0.0
    %v173 = vmax.f32 %v171, 0.0
    %vm174 = vcmp.lt.s32.totalorder %v126, 6
    %vm175 = vcmp.lt.s32.totalorder %v127, 6
    %v176 = vsel %vm174, 1, 0
    %v177 = vsel %vm175, 1, 0
    %v178 = vcvt.s32.f32 %v176
    %v179 = vcvt.s32.f32 %v177
    %v180 = vmul.f32 %v172, %v178
    %v181 = vmul.f32 %v173, %v179
    %184 = vrot.lane.b32.xlu0 %v101, 122
    %v185 = vpop.permute.xlu0 %184
    %186 = vrot.lane.b32.xlu0 %v102, 122
    %v187 = vpop.permute.xlu0 %186
    %v190 = vadd.f32 %v165, %v185
    %v191 = vadd.f32 %v166, %v187
    %192 = vrot.lane.b32.xlu0 %v143, 6
    %v193 = vpop.permute.xlu0 %192
    %v195 = vadd.f32 %v190, %v193
    %v196 = vadd.f32 %v191, %v193
    %v197 = vmax.f32 %v195, 0.0
    %v198 = vmax.f32 %v196, 0.0
    %vm199 = vcmp.lt.s32.totalorder %v126, 5
    %vm200 = vcmp.lt.s32.totalorder %v127, 5
    %v201 = vsel %vm199, 1, 0
    %v202 = vsel %vm200, 1, 0
    %v203 = vcvt.s32.f32 %v201
    %v204 = vcvt.s32.f32 %v202
    %v205 = vmul.f32 %v197, %v203
    %v206 = vmul.f32 %v198, %v204
    %209 = vrot.lane.b32.xlu0 %v180, 126
    %v210 = vpop.permute.xlu0 %209
    %211 = vrot.lane.b32.xlu0 %v181, 126
    %v212 = vpop.permute.xlu0 %211
    %217 = vrot.lane.b32.xlu0 %v205, 122
    %v218 = vpop.permute.xlu0 %217
    %219 = vrot.lane.b32.xlu0 %v206, 122
    %v220 = vpop.permute.xlu0 %219
    %vm223 = vcmask 15360
    %v224 = vsel %vm223, %v155, %v210
    %v225 = vsel %vm223, %v156, %v212
    %vm226 = vcmask 31744
    %v227 = vsel %vm226, %v224, %v218
    %v228 = vsel %vm226, %v225, %v220
    %vm229 = vcmask 48128
    %v230 = vsel %vm229, %v227, -inf
    %v231 = vrot.slane %v230, 4
    %v232 = vmax.f32 %v230, %v231
    %v233 = vrot.slane %v232, 2
    %v234 = vmax.f32 %v232, %v233
    %v235 = vrot.slane %v234, 1
    %v236 = vmax.f32 %v234, %v235
    %v237 = vsel %vm229, %v228, -inf
    %v238 = vrot.slane %v237, 4
    %v239 = vmax.f32 %v237, %v238
    %v240 = vrot.slane %v239, 2
    %v241 = vmax.f32 %v239, %v240
    %v242 = vrot.slane %v241, 1
    %v243 = vmax.f32 %v241, %v242
    %v244 = vld [vmem:[%s4] sm:$0x1]
    %v245 = vld [vmem:[%s3] sm:$0x3f]
    %vm248 = vcmask 1041409
    %v249 = vsel %vm248, %v243, %v236
    %v250 = vsel %vm229, %v249, 0
    %vm252 = vcmask 1045504
    %v254 = vsel %vm252, %v245, 0
    %256 = vmatprep.subr.mxu0 0.0
    %257 = vmatpush1.msra.mxu0 %v254
    %258 = vmatprep.subr.mxu0 0.0
    %259 = vmatpush1.msra.mxu0 0.0
    %260 = vmatprep.subr.mxu0 0.0
    %261 = vmatpush1.msra.mxu0 0.0
    %262 = vmatprep.subr.mxu0 0.0
    %263 = vmatpush1.msra.mxu0 0.0
    %264 = vmatprep.subr.mxu0 0.0
    %265 = vmatpush1.msra.mxu0 0.0
    %266 = vmatprep.subr.mxu0 0.0
    %267 = vmatpush1.msra.mxu0 0.0
    %268 = vmatprep.subr.mxu0 0.0
    %269 = vmatpush1.msra.mxu0 0.0
    %270 = vmatprep.subr.mxu0 0.0
    %271 = vmatpush1.msra.mxu0 0.0
    %272 = vmatprep.subr.mxu0 0.0
    %273 = vmatpush1.msra.mxu0 0.0
    %274 = vmatprep.subr.mxu0 0.0
    %275 = vmatpush1.msra.mxu0 0.0
    %276 = vmatprep.subr.mxu0 0.0
    %277 = vmatpush1.msra.mxu0 0.0
    %278 = vmatprep.subr.mxu0 0.0
    %279 = vmatpush1.msra.mxu0 0.0
    %280 = vmatprep.subr.mxu0 0.0
    %281 = vmatpush1.msra.mxu0 0.0
    %282 = vmatprep.subr.mxu0 0.0
    %283 = vmatpush1.msra.mxu0 0.0
    %284 = vmatprep.subr.mxu0 0.0
    %285 = vmatpush1.msra.mxu0 0.0
    %286 = vmatprep.subr.mxu0 0.0
    %287 = vmatpush1.msra.mxu0 0.0
    %288 = vmatprep.subr.mxu0 0.0
    %289 = vmatpush1.msra.mxu0 0.0
    %290 = vmatprep.subr.mxu0 0.0
    %291 = vmatpush1.msra.mxu0 0.0
    %292 = vmatprep.subr.mxu0 0.0
    %293 = vmatpush1.msra.mxu0 0.0
    %294 = vmatprep.subr.mxu0 0.0
    %295 = vmatpush1.msra.mxu0 0.0
    %296 = vmatprep.subr.mxu0 0.0
    %297 = vmatpush1.msra.mxu0 0.0
    %298 = vmatprep.subr.mxu0 0.0
    %299 = vmatpush1.msra.mxu0 0.0
    %300 = vmatprep.subr.mxu0 0.0
    %301 = vmatpush1.msra.mxu0 0.0
    %302 = vmatprep.subr.mxu0 0.0
    %303 = vmatpush1.msra.mxu0 0.0
    %304 = vmatprep.subr.mxu0 0.0
    %305 = vmatpush1.msra.mxu0 0.0
    %306 = vmatprep.subr.mxu0 0.0
    %307 = vmatpush1.msra.mxu0 0.0
    %308 = vmatprep.subr.mxu0 0.0
    %309 = vmatpush1.msra.mxu0 0.0
    %310 = vmatprep.subr.mxu0 0.0
    %311 = vmatpush1.msra.mxu0 0.0
    %312 = vmatprep.subr.mxu0 0.0
    %313 = vmatpush1.msra.mxu0 0.0
    %314 = vmatprep.subr.mxu0 0.0
    %315 = vmatpush1.msra.mxu0 0.0
    %316 = vmatprep.subr.mxu0 0.0
    %317 = vmatpush1.msra.mxu0 0.0
    %318 = vmatprep.subr.mxu0 0.0
    %319 = vmatpush1.msra.mxu0 0.0
    %320 = vmatprep.mubr.f32.mxu0 0.0
    %321 = vmatmul.mubr.f32.gmra.mrb[0].mxu0 %v250
    %v322 = vpop.f32.mrb[0].mxu0
    %v323 = vadd.f32 0.0, %v322
    %v324 = vpop.f32.mrb[0].mxu0
    %325 = vdwg.mxu0
    %v327 = vlaneseq
    %v328 = vshrl.u32 %v327, 7
    %v329 = vsub.s32 0, %v328
    %v330 = vrot.slane %v244, %v329
    %v332 = vadd.f32 %v330, %v323
    %vm333 = vcmask 1041408
    %v334 = vsel %vm333, %v332, -inf
    %335 = vmax.xlane.f32.xlu0 %v334
    %v336 = vpop.xlane.xlu0 %335
    %v337 = vsub.f32 %v332, %v336
    %v338 = vmul.f32 %v337, 1.442695
    %v339 = vpow.pop %v338
    %v340 = vsel %vm333, %v339, 0.0
    %341 = vadd.xlane.f32.xlu0 %v340
    %v342 = vpop.xlane.xlu0 %341
    %v343 = vrcp.pop %v342
    %v344 = vmul.f32 %v339, %v343
    %345 = vst [vmem:[#allocation2] sm:$0x3] %v344
    // Predicated region
    $region22: #{tpu_custom_call.1} parent=1 // pred_check
      _
    $region23: #{tpu_custom_call.1} parent=1 // pred_check_branch
      %347 = sbr.rel (0) target = $region25
    $region24: #{tpu_custom_call.1} parent=1 // pred_region
      %s349 = ssub.s32 32, 32
      %350 = vsyncadd [#allocation3], %s349
      %s352 = sshll.u32 [#allocation2], 4
      %s353 = int_to_ptr.vmem [resolvable:$true] %s352
      %355 = dma.vmem_to_hbm [thread:$0]  %s353, 32, %s5, [#allocation3]
    $region25: #{tpu_custom_call.1} parent=1 // pred_fallthru
      _
    // Predicated region
    $region26: #{tpu_custom_call.1} parent=1 // pred_check
      _
    $region27: #{tpu_custom_call.1} parent=1 // pred_check_branch
      %357 = sbr.rel (0) target = $region29
    $region28: #{tpu_custom_call.1} parent=1 // pred_region
      %358 = dma.done [#allocation3], 32
    $region29: #{tpu_custom_call.1} parent=1 // pred_fallthru
      _
    %359 = vsyncpa [#allocation3], 1

</llo_original>
